<compile_context>
chip_gen: v7x
topology: tpu7x:2x2x1
jax: 0.10.0
libtpu: 0.0.40
codegen_flags: <defaults>
</compile_context>

<pallas_src>
import numpy as np
import jax
import jax.numpy as jnp
from jax import lax
from jax.experimental import pallas as pl
from jax.experimental.pallas import tpu as pltpu


def _choose_spatial_tile(S, C, dtype_bytes, target_bytes=2 << 20, max_lanes=4096):
    """Byte-budget spatial tile: a multiple of 128 with C*TS*dtype ~ target_bytes.

    Keeps tiles lane-dense and large (>=512 lanes where possible, ~85% of HBM
    roofline per measured data), while the ~2 MiB budget keeps the pipelined
    VMEM footprint safe on all of v5e / v6e / v7x.
    """
    lane_budget = target_bytes // max(1, C * dtype_bytes)
    lane_budget = max(128, (lane_budget // 128) * 128)
    lane_budget = min(lane_budget, max_lanes)

    s128 = ((S + 127) // 128) * 128
    if s128 <= lane_budget:
        return s128                      # whole (128-padded) spatial extent fits one tile

    # Prefer a divisor of the 128-padded extent (avoids an extra pad copy of x).
    best = 128
    t = 256
    while t <= lane_budget:
        if s128 % t == 0:
            best = t
        t += 128
    if best >= 512:
        return best
    # No reasonable divisor: accept padding S up to a multiple of the budget
    # instead of falling back to tiny 128-lane tiles or a full-extent block.
    return lane_budget


def channel_spatial_se_3d(x, w1, b1, w2, b2, wsp, bsp):
    """x: (B, C, D, H, W).  Parameter layouts follow nn.Linear / nn.Conv3d:
       w1: (Cr, C), b1: (Cr, 1), w2: (C, Cr), b2: (C, 1), wsp: (1, C), bsp: (1, 1)."""
    B, C, D, H, W = x.shape
    S = D * H * W
    TS = _choose_spatial_tile(S, C, x.dtype.itemsize)
    S_pad = ((S + TS - 1) // TS) * TS
    n_s = S_pad // TS
    inv_s = 1.0 / float(S)

    # Megacore split of the pass-1 spatial axis: outer "parallel" axis keeps
    # both v7x TensorCores busy even when B is 1 / odd; harmless on v5e/v6e.
    n_outer = 1
    for cand in (4, 2):
        if n_s % cand == 0:
            n_outer = cand
            break
    n_inner = n_s // n_outer

    xr = x.reshape(B, C, S)
    if S_pad != S:
        # Zero padding keeps every grid block full; zeros add nothing to the sum
        # and the padded output columns are sliced off below.
        xr = jnp.pad(xr, ((0, 0), (0, 0), (0, S_pad - S)))

    # ---------------- pass 1: per-(B, C) channel partial sums (f32 on MXU) ----------------
    def _sum_kernel(x_ref, psum_ref):
        si = pl.program_id(2)

        @pl.when(si == 0)
        def _init():
            psum_ref[0, 0] = jnp.zeros((C, 1), jnp.float32)

        x_blk = x_ref[0]                                   # (C, TS), native dtype
        ones = jnp.ones((TS, 1), x_blk.dtype)
        # MXU matvec: contracts the lane axis with f32 accumulation; avoids a
        # full (C, TS) f32 cast temporary every step.
        psum_ref[0, 0] += lax.dot_general(
            x_blk, ones, (((1,), (0,)), ((), ())),
            preferred_element_type=jnp.float32)

    # NOTE: if profiling shows exposed DMA here (compute per step is tiny), the
    # x BlockSpec can take pipeline_mode=pl.Buffered(3) -- only with VMEM headroom.
    psums = pl.pallas_call(
        _sum_kernel,
        out_shape=jax.ShapeDtypeStruct((B, n_outer, C, 1), jnp.float32),
        grid=(B, n_outer, n_inner),
        in_specs=[pl.BlockSpec((1, C, TS),
                               lambda b, so, si: (b, 0, so * n_inner + si))],
        out_specs=pl.BlockSpec((1, 1, C, 1), lambda b, so, si: (b, so, 0, 0)),
        compiler_params=pltpu.CompilerParams(
            dimension_semantics=("parallel", "parallel", "arbitrary")),
    )(xr)

    # ------------- tiny SE MLP on (B, C): plain JAX (too small for the MXU) --------
    s_bc = (jnp.sum(psums[:, :, :, 0], axis=1) * inv_s).astype(jnp.float32)   # (B, C)
    h = jax.nn.relu(s_bc @ w1.astype(jnp.float32).T
                    + b1.astype(jnp.float32)[:, 0])                           # (B, Cr)
    chan_gate = jax.nn.sigmoid(h @ w2.astype(jnp.float32).T
                               + b2.astype(jnp.float32)[:, 0])                # (B, C)
    half_cgate = (0.5 * chan_gate).reshape(B, C, 1).astype(jnp.float32)       # 0.5 folded in

    wsp_row = wsp.reshape(1, C).astype(x.dtype)            # sSE conv weight row (for MXU dot)
    bsp_s = bsp.reshape(1, 1).astype(jnp.float32)          # sSE conv bias -> SMEM

    # ------------- pass 2: spatial gate + combine, tiled over (B, S_pad//TS) -----------
    def _combine_kernel(x_ref, cgate_ref, wsp_ref, bsp_ref, o_ref):
        x_blk = x_ref[0]                                   # (C, TS), native dtype
        # sSE 1x1x1 conv over channels on the (otherwise idle) MXU, f32 accumulation.
        sp_lin = lax.dot_general(
            wsp_ref[...], x_blk, (((1,), (0,)), ((), ())),
            preferred_element_type=jnp.float32) + bsp_ref[0, 0]               # (1, TS) f32
        # Two broadcast gates in the input dtype; no (C, TS) f32 gate temporary.
        # TODO(synk): for bf16 inputs the gate multiplies run in bf16 (reference
        # multiplies in f32 then casts); validate bf16 with a looser tolerance.
        sgate = (0.5 * jax.nn.sigmoid(sp_lin)).astype(x_blk.dtype)            # (1, TS)
        cgate = cgate_ref[0].astype(x_blk.dtype)                              # (C, 1)
        o_ref[0] = (x_blk * cgate + x_blk * sgate).astype(o_ref.dtype)

    out = pl.pallas_call(
        _combine_kernel,
        out_shape=jax.ShapeDtypeStruct((B, C, S_pad), x.dtype),
        grid=(B, n_s),
        in_specs=[
            pl.BlockSpec((1, C, TS), lambda b, s: (b, 0, s)),   # x tile
            pl.BlockSpec((1, C, 1), lambda b, s: (b, 0, 0)),    # 0.5 * channel gate
            pl.BlockSpec((1, C), lambda b, s: (0, 0)),          # sSE conv weight row
            pl.BlockSpec(memory_space=pltpu.MemorySpace.SMEM),  # sSE conv bias scalar
        ],
        out_specs=pl.BlockSpec((1, C, TS), lambda b, s: (b, 0, s)),
        compiler_params=pltpu.CompilerParams(
            dimension_semantics=("parallel", "parallel")),
    )(xr, half_cgate, wsp_row, bsp_s)

    if S_pad != S:
        out = out[:, :, :S]
    # TODO(synk): with C below the native sublane tile (C<8 f32 / C<16 bf16, as in
    # the tiny demo) every vreg/DMA burst is >=50% channel padding; for realistic
    # networks C >= 16 so the (1, C, TS) blocking is sublane-dense.
    return out.reshape(B, C, D, H, W)


def reference_forward(x, w1, b1, w2, b2, wsp, bsp):
    """Pure-JAX reference replicating the PyTorch forward."""
    xf = x.astype(jnp.float32)
    # cSE
    s = jnp.mean(xf, axis=(2, 3, 4))                                  # (B, C)
    h = jax.nn.relu(s @ w1.T + b1[:, 0])                              # (B, Cr)
    g = jax.nn.sigmoid(h @ w2.T + b2[:, 0])                           # (B, C)
    cse = xf * g[:, :, None, None, None]
    # sSE
    t = jax.nn.sigmoid(jnp.einsum('bcdhw,c->bdhw', xf, wsp[0]) + bsp[0, 0])
    sse = xf * t[:, None, :, :, :]
    return ((cse + sse) * 0.5).astype(x.dtype)


if __name__ == "__main__":
    B, C = 2, 4
    D = H = W = 8
    reduction_ratio = 2
    Cr = C // reduction_ratio

    key = jax.random.PRNGKey(0)
    kx, k1, k2, k3, k4, k5, k6 = jax.random.split(key, 7)

    x = jax.random.normal(kx, (B, C, D, H, W), dtype=jnp.float32)

    # Parameter shapes from the module's __init__:
    #   fc1: Linear(C -> Cr), fc2: Linear(Cr -> C), conv: Conv3d(C -> 1, k=1)
    w1 = 0.3 * jax.random.normal(k1, (Cr, C), dtype=jnp.float32)
    b1 = 0.1 * jax.random.normal(k2, (Cr, 1), dtype=jnp.float32)
    w2 = 0.3 * jax.random.normal(k3, (C, Cr), dtype=jnp.float32)
    b2 = 0.1 * jax.random.normal(k4, (C, 1), dtype=jnp.float32)
    wsp = 0.3 * jax.random.normal(k5, (1, C), dtype=jnp.float32)
    bsp = 0.1 * jax.random.normal(k6, (1, 1), dtype=jnp.float32)

    out = channel_spatial_se_3d(x, w1, b1, w2, b2, wsp, bsp)
    out = jax.block_until_ready(out)

    ref = reference_forward(x, w1, b1, w2, b2, wsp, bsp)
    assert out.shape == (B, C, D, H, W)
    np.testing.assert_allclose(np.asarray(out), np.asarray(ref),
                               rtol=1e-5, atol=1e-5)

    print("KERNEL_OK")
</pallas_src>

<mosaic_0001>
module attributes {stable_mosaic.version = 11 : i64} {
  func.func @_sum_kernel(%arg0: i32, %arg1: i32, %arg2: i32, %arg3: memref<1x4x512xf32, #tpu.memory_space<vmem>>, %arg4: memref<1x1x4x1xf32, #tpu.memory_space<vmem>>) attributes {dimension_semantics = [#tpu.dimension_semantics<parallel>, #tpu.dimension_semantics<parallel>, #tpu.dimension_semantics<arbitrary>], iteration_bounds = array<i64: 2, 1, 1>, scalar_prefetch = 0 : i64, scratch_operands = 0 : i64, tpu.core_type = #tpu.core_type<tc>, window_params = [{transform_indices = @transform_0, window_bounds = array<i64: 1, 4, 512>}, {transform_indices = @transform_1, window_bounds = array<i64: 1, 1, 4, 1>}]} {
    %c0_i32 = arith.constant 0 : i32
    %0 = arith.cmpi eq, %arg2, %c0_i32 : i32
    %1 = arith.extui %0 : i1 to i32
    %c0_i32_0 = arith.constant 0 : i32
    %2 = arith.cmpi ne, %1, %c0_i32_0 : i32
    scf.if %2 {
      %cst_12 = arith.constant 0.000000e+00 : f32
      %13 = vector.broadcast %cst_12 : f32 to vector<4x1xf32>
      %c0_13 = arith.constant 0 : index
      %c0_14 = arith.constant 0 : index
      %c0_15 = arith.constant 0 : index
      %c0_16 = arith.constant 0 : index
      %14 = vector.load %arg4[%c0_13, %c0_14, %c0_15, %c0_16] : memref<1x1x4x1xf32, #tpu.memory_space<vmem>>, vector<1x1x4x1xf32>
      %15 = vector.shape_cast %14 : vector<1x1x4x1xf32> to vector<4x1xf32>
      %16 = vector.shape_cast %13 : vector<4x1xf32> to vector<1x1x4x1xf32>
      tpu.vector_store %arg4[%c0_13, %c0_14, %c0_15, %c0_16], %16 {strides = array<i32>} : memref<1x1x4x1xf32, #tpu.memory_space<vmem>>, vector<1x1x4x1xf32>,
    } else {
    }
    %c0 = arith.constant 0 : index
    %c0_1 = arith.constant 0 : index
    %c0_2 = arith.constant 0 : index
    %3 = vector.load %arg3[%c0, %c0_1, %c0_2] : memref<1x4x512xf32, #tpu.memory_space<vmem>>, vector<1x4x512xf32>
    %4 = vector.shape_cast %3 : vector<1x4x512xf32> to vector<4x512xf32>
    %cst = arith.constant 1.000000e+00 : f32
    %5 = vector.broadcast %cst : f32 to vector<512x1xf32>
    %c0_3 = arith.constant 0 : index
    %c0_4 = arith.constant 0 : index
    %c0_5 = arith.constant 0 : index
    %c0_6 = arith.constant 0 : index
    %6 = vector.load %arg4[%c0_3, %c0_4, %c0_5, %c0_6] : memref<1x1x4x1xf32, #tpu.memory_space<vmem>>, vector<1x1x4x1xf32>
    %7 = vector.shape_cast %6 : vector<1x1x4x1xf32> to vector<4x1xf32>
    %cst_7 = arith.constant dense<0.000000e+00> : vector<4x1xf32>
    %8 = tpu.matmul %4, %5, %cst_7 {dimension_numbers = #tpu.dot_dimension_numbers<[1], [0], [0], [1], [0, 0, 1, 1], [], []>} : vector<4x512xf32>, vector<512x1xf32>, vector<4x1xf32> -> vector<4x1xf32>
    %9 = arith.addf %7, %8 : vector<4x1xf32>
    %c0_8 = arith.constant 0 : index
    %c0_9 = arith.constant 0 : index
    %c0_10 = arith.constant 0 : index
    %c0_11 = arith.constant 0 : index
    %10 = vector.load %arg4[%c0_8, %c0_9, %c0_10, %c0_11] : memref<1x1x4x1xf32, #tpu.memory_space<vmem>>, vector<1x1x4x1xf32>
    %11 = vector.shape_cast %10 : vector<1x1x4x1xf32> to vector<4x1xf32>
    %12 = vector.shape_cast %9 : vector<4x1xf32> to vector<1x1x4x1xf32>
    tpu.vector_store %arg4[%c0_8, %c0_9, %c0_10, %c0_11], %12 {strides = array<i32>} : memref<1x1x4x1xf32, #tpu.memory_space<vmem>>, vector<1x1x4x1xf32>,
    return
  }
  func.func @transform_0(%arg0: i32, %arg1: i32, %arg2: i32) -> (i32, i32, i32) {
    %c1_i32 = arith.constant 1 : i32
    %0 = arith.muli %arg1, %c1_i32 : i32
    %1 = arith.addi %0, %arg2 : i32
    %c0_i32 = arith.constant 0 : i32
    %c0_i32_0 = arith.constant 0 : i32
    return %arg0, %c0_i32, %1 : i32, i32, i32
  }
  func.func @transform_1(%arg0: i32, %arg1: i32, %arg2: i32) -> (i32, i32, i32, i32) {
    %c0_i32 = arith.constant 0 : i32
    %c0_i32_0 = arith.constant 0 : i32
    %c0_i32_1 = arith.constant 0 : i32
    return %arg0, %arg1, %c0_i32, %c0_i32_0 : i32, i32, i32, i32
  }
}

</mosaic_0001>

<llo_original>
// kernel: tpu_custom_call.1
$region0: #{tpu_custom_call.1}
  #allocation0 [shape = 'u32[]', space=smem, size = 0x4, offset = 0x4, fixed_abs, tag = 'smem constant byte address 0x4 - core index']
  #allocation1 [shape = 'u32[144,128]{1,0:T(1,128)}', space=vmem, size = 0x12000, scoped, tag = 'internal scratch']
  %s0 = inlined_call_operand.hbm [shape: f32[2,4,512], index: 0, kind: input, shape index: {}]
  %s1 = inlined_call_operand.vmem [shape: f32[2,1,4,1], index: 1, kind: output, shape index: {}]
  %s2 = sld [smem:[#allocation0]]
  $region45: #{tpu_custom_call.1} parent=0
    _
  %s4 = ssub.s32 1, %s2
  %s5 = scalar_select 0, %s4, %s2
  $region1: #{tpu_custom_call.1} parent=0
    #allocation2 [shape = 'u8[16384]{0}', space=vmem, size = 0x4000, scoped, tag = 'input window, operand 0']
    #allocation3 [shape = 's32[2]{0}', space=sflag, size = 0x8, scoped, tag = 'scoped memory for tpu_custom_call.1']
    %6 = vsyncpa [#allocation3], 0
    %s7 = scalar_lea.sflag [#allocation3], 1
    %8 = vsyncpa %s7, 0
    loop: start=0, step=1, limit=4
    $region2: #{tpu_custom_call.1} parent=1 // loop_pre_header
      _
    $region3: #{tpu_custom_call.1} parent=1 // loop_header
      %s10 = sphi 0, %s14
      %p11 = scmp.ge.s32.totalorder %s10, 4
      %s17 = sphi 0, %s36
      %s18 = sphi 0, %s32
      %s19 = sphi 0, %s28
      %s20 = sphi 0, %s17
      %s21 = sphi 0, %s18
      %s22 = sphi 0, %s19
      %s23 = sphi 0, %s20
      %s24 = sphi 0, %s21
      %s25 = sphi 0, %s22
      %s43 = sphi 0, %s45
      %s46 = sphi 0, %s43
      %s47 = sphi 0, %s46
      %s63 = sphi 0, %s47
      %s71 = sphi 0, %s73
      %s74 = sphi 0, %s71
      %s75 = sphi 0, %s74
      %s91 = sphi 0, %s75
    $region4: #{tpu_custom_call.1} parent=1 // loop_header_branch
      %13 = sbr.rel (%p11) target = $region8
    $region5: #{tpu_custom_call.1} parent=1 // loop_body
      %s15 = ssub.s32 %s10, 1
      %s16 = ssub.s32 %s10, 2
      %s26 = sadd.s32 1, %s19
      %p27 = scmp.ge.s32.totalorder %s26, 1
      %s28 = scalar_select %p27, 0, %s26
      %s29 = sadd.s32 1, %s18
      %s30 = scalar_select %p27, %s29, %s18
      %p31 = scmp.ge.s32.totalorder %s30, 1
      %s32 = scalar_select %p31, 0, %s30
      %s33 = sadd.s32 1, %s17
      %s34 = scalar_select %p31, %s33, %s17
      %p35 = scmp.ge.s32.totalorder %s34, 2
      %s36 = scalar_select %p35, 0, %s34
      %s37 = sadd.s32 %s18, %s19
      %s38 = sadd.s32 %s32, %s28
      %s39 = ssub.s32 %s17, %s36
      %s40 = ssub.s32 %s37, %s38
      %s41 = sor.u32 %s39, %s40
      %p42 = scmp.eq.s32.totalorder %s41, 0
      %s44 = sadd.s32 %s43, 1
      %s45 = scalar_select %p42, %s43, %s44
      %p48 = pneg %p42
      %p49 = scmp.eq.s32.totalorder %s10, 1
      %p50 = por %p48, %p49
      %p51 = scmp.ne.s32.totalorder %s43, %s46
      %p52 = scmp.eq.s32.totalorder %s10, 0
      %p53 = por %p51, %p52
      %p54 = scmp.ne.s32.totalorder %s43, %s46
      %p55 = scmp.eq.s32.totalorder %s15, 1
      %p56 = por %p54, %p55
      %p57 = scmp.ne.s32.totalorder %s46, %s47
      %p58 = scmp.eq.s32.totalorder %s15, 0
      %p59 = por %p57, %p58
      %p60 = scmp.ne.s32.totalorder %s46, %s47
      %p61 = scmp.eq.s32.totalorder %s16, 1
      %p62 = por %p60, %p61
      %p64 = scmp.ne.s32.totalorder %s47, %s63
      %p65 = scmp.eq.s32.totalorder %s16, 0
      %p66 = por %p64, %p65
      %s67 = ssub.s32 %s17, %s36
      %s68 = ssub.s32 %s18, %s32
      %s69 = sor.u32 %s67, %s68
      %p70 = scmp.eq.s32.totalorder %s69, 0
      %s72 = sadd.s32 %s71, 1
      %s73 = scalar_select %p70, %s71, %s72
      %p76 = pneg %p70
      %p77 = scmp.eq.s32.totalorder %s10, 1
      %p78 = por %p76, %p77
      %p79 = scmp.ne.s32.totalorder %s71, %s74
      %p80 = scmp.eq.s32.totalorder %s10, 0
      %p81 = por %p79, %p80
      %p82 = scmp.ne.s32.totalorder %s71, %s74
      %p83 = scmp.eq.s32.totalorder %s15, 1
      %p84 = por %p82, %p83
      %p85 = scmp.ne.s32.totalorder %s74, %s75
      %p86 = scmp.eq.s32.totalorder %s15, 0
      %p87 = por %p85, %p86
      %p88 = scmp.ne.s32.totalorder %s74, %s75
      %p89 = scmp.eq.s32.totalorder %s16, 1
      %p90 = por %p88, %p89
      %p92 = scmp.ne.s32.totalorder %s75, %s91
      %p93 = scmp.eq.s32.totalorder %s16, 0
      %p94 = por %p92, %p93
      %p95 = scmp.le.s32.totalorder 1, %s10
      %p96 = scmp.lt.s32.totalorder %s10, 3
      %p97 = pnand %p95, %p96
      %p98 = pneg %p97
      // Predicated region
      $region9: #{tpu_custom_call.1} parent=5 // pred_check
        _
      $region10: #{tpu_custom_call.1} parent=5 // pred_check_branch
        %100 = sbr.rel (%p97) target = $region12
      $region11: #{tpu_custom_call.1} parent=5 // pred_region
        %s101 = ssub.s32 %s10, 1
      $region12: #{tpu_custom_call.1} parent=5 // pred_fallthru
        _
      %p102 = scmp.lt.s32.totalorder %s10, 2
      // Predicated region
      $region13: #{tpu_custom_call.1} parent=5 // pred_check
        %p103 = pneg %p102
      $region14: #{tpu_custom_call.1} parent=5 // pred_check_branch
        %105 = sbr.rel (%p103) target = $region16
      $region15: #{tpu_custom_call.1} parent=5 // pred_region
        // Predicated region
        $region17: #{tpu_custom_call.1} parent=15 // pred_check
          %p106 = pneg %p53
        $region18: #{tpu_custom_call.1} parent=15 // pred_check_branch
          %108 = sbr.rel (%p106) target = $region20
        $region19: #{tpu_custom_call.1} parent=15 // pred_region
          %s109 = sand.u32 %s43, 1
          %s110 = scalar_lea.sflag [#allocation3], %s109
          %s111 = sand.u32 %s43, 1
          %s112 = smul.addr %s111, 16
          %s113 = scalar_lea.vmem [#allocation2], %s112
          %s114 = sadd.s32 %s18, %s19
          %s115 = smul.u32 4, %s114
          %s117 = ssub.s32 256, 256
          %118 = vsyncadd %s110, %s117
          %s119 = smul.addr %s17, 4
          %s120 = sadd.s32 %s115, %s119
          %s121 = smul.addr %s120, 64
          %s122 = scalar_lea.hbm %s0, %s121
          %s124 = sshll.u32 %s113, 4
          %s125 = int_to_ptr.vmem [resolvable:$true] %s124
          %127 = dma.hbm_to_vmem [thread:$0]  %s122, 256, %s125, %s110
        $region20: #{tpu_custom_call.1} parent=15 // pred_fallthru
          _
      $region16: #{tpu_custom_call.1} parent=5 // pred_fallthru
        _
      %p128 = scmp.le.s32.totalorder 1, %s10
      %p129 = scmp.lt.s32.totalorder %s10, 3
      %p130 = pnand %p128, %p129
      %p131 = pneg %p130
      // Predicated region
      $region21: #{tpu_custom_call.1} parent=5 // pred_check
        _
      $region22: #{tpu_custom_call.1} parent=5 // pred_check_branch
        %133 = sbr.rel (%p130) target = $region24
      $region23: #{tpu_custom_call.1} parent=5 // pred_region
        %s134 = ssub.s32 %s10, 1
        %s135 = sand.u32 %s46, 1
        %s136 = scalar_lea.sflag [#allocation3], %s135
        %s137 = sand.u32 %s46, 1
        %s138 = smul.addr %s137, 16
        %s139 = scalar_lea.vmem [#allocation2], %s138
        // Predicated region
        $region25: #{tpu_custom_call.1} parent=23 // pred_check
          %p140 = pneg %p59
        $region26: #{tpu_custom_call.1} parent=23 // pred_check_branch
          %142 = sbr.rel (%p140) target = $region28
        $region27: #{tpu_custom_call.1} parent=23 // pred_region
          %143 = dma.done %s136, 256
        $region28: #{tpu_custom_call.1} parent=23 // pred_fallthru
          _
        %s144 = sand.u32 %s46, 1
        %s145 = scalar_lea.sflag [#allocation3], %s144
        %s146 = sand.u32 %s46, 1
        %s147 = smul.addr %s146, 16
        %s148 = scalar_lea.vmem [#allocation2], %s147
        %p149 = pneg %p59
        %p150 = pneg %p56
        %p151 = pneg %p87
        %p152 = pneg %p84
        %p153 = scmp.lt.s32.totalorder %s20, 1
        %s154 = scalar_select %p153, %s20, 1
        %p155 = scmp.lt.s32.totalorder %s21, 0
        %s156 = scalar_select %p155, %s21, 0
        %s157 = sadd.s32 %s156, %s154
        %s158 = smul.addr %s157, 4
        %s159 = scalar_lea.vmem %s1, %s158
        %s160 = sadd.s32 %s21, %s22
        %s161 = smul.u32 4, %s160
        %p162 = scmp.lt.s32.totalorder %s20, 1
        %s163 = scalar_select %p162, %s20, 1
        %p164 = scmp.lt.s32.totalorder %s21, 0
        %s165 = scalar_select %p164, %s21, 0
        %s166 = sadd.s32 %s165, %s163
        %s167 = smul.addr %s166, 4
        %s168 = scalar_lea.vmem %s1, %s167
        %p169 = scmp.eq.s32.totalorder %s22, 0
        // Predicated region
        $region29: #{tpu_custom_call.1} parent=23 // pred_check
          %p170 = pneg %p169
        $region30: #{tpu_custom_call.1} parent=23 // pred_check_branch
          %172 = sbr.rel (%p170) target = $region32
        $region31: #{tpu_custom_call.1} parent=23 // pred_region
          %vm173 = vcmask 3072
          %174 = vst.msk [vmem:[%s168] sm:$0xf] %vm173, 0.0
        $region32: #{tpu_custom_call.1} parent=23 // pred_fallthru
          _
        %v175 = vld [vmem:[%s139] sm:$0xff]
        %v176 = vld [vmem:[%s139 + $0x8] sm:$0xff]
        %v177 = vld [vmem:[%s168] sm:$0xf]
        %v180 = vcombine.high %v175, %v175
        %v181 = vcombine.high %v176, %v176
        %184 = vmatprep.subr.mxu0 0.0
        %185 = vmatpush1.msra.mxu0 1.0
        %186 = vmatprep.subr.mxu0 0.0
        %187 = vmatpush1.msra.mxu0 1.0
        %188 = vmatprep.subr.mxu0 0.0
        %189 = vmatpush1.msra.mxu0 1.0
        %190 = vmatprep.subr.mxu0 0.0
        %191 = vmatpush1.msra.mxu0 1.0
        %192 = vmatprep.subr.mxu0 0.0
        %193 = vmatpush1.msra.mxu0 1.0
        %194 = vmatprep.subr.mxu0 0.0
        %195 = vmatpush1.msra.mxu0 1.0
        %196 = vmatprep.subr.mxu0 0.0
        %197 = vmatpush1.msra.mxu0 1.0
        %198 = vmatprep.subr.mxu0 0.0
        %199 = vmatpush1.msra.mxu0 1.0
        %200 = vmatprep.subr.mxu0 0.0
        %201 = vmatpush1.msra.mxu0 1.0
        %202 = vmatprep.subr.mxu0 0.0
        %203 = vmatpush1.msra.mxu0 1.0
        %204 = vmatprep.subr.mxu0 0.0
        %205 = vmatpush1.msra.mxu0 1.0
        %206 = vmatprep.subr.mxu0 0.0
        %207 = vmatpush1.msra.mxu0 1.0
        %208 = vmatprep.subr.mxu0 0.0
        %209 = vmatpush1.msra.mxu0 1.0
        %210 = vmatprep.subr.mxu0 0.0
        %211 = vmatpush1.msra.mxu0 1.0
        %212 = vmatprep.subr.mxu0 0.0
        %213 = vmatpush1.msra.mxu0 1.0
        %214 = vmatprep.subr.mxu0 0.0
        %215 = vmatpush1.msra.mxu0 1.0
        %216 = vmatprep.subr.mxu0 0.0
        %217 = vmatpush1.msra.mxu0 1.0
        %218 = vmatprep.subr.mxu0 0.0
        %219 = vmatpush1.msra.mxu0 1.0
        %220 = vmatprep.subr.mxu0 0.0
        %221 = vmatpush1.msra.mxu0 1.0
        %222 = vmatprep.subr.mxu0 0.0
        %223 = vmatpush1.msra.mxu0 1.0
        %224 = vmatprep.subr.mxu0 0.0
        %225 = vmatpush1.msra.mxu0 1.0
        %226 = vmatprep.subr.mxu0 0.0
        %227 = vmatpush1.msra.mxu0 1.0
        %228 = vmatprep.subr.mxu0 0.0
        %229 = vmatpush1.msra.mxu0 1.0
        %230 = vmatprep.subr.mxu0 0.0
        %231 = vmatpush1.msra.mxu0 1.0
        %232 = vmatprep.subr.mxu0 0.0
        %233 = vmatpush1.msra.mxu0 1.0
        %234 = vmatprep.subr.mxu0 0.0
        %235 = vmatpush1.msra.mxu0 1.0
        %236 = vmatprep.subr.mxu0 0.0
        %237 = vmatpush1.msra.mxu0 1.0
        %238 = vmatprep.subr.mxu0 0.0
        %239 = vmatpush1.msra.mxu0 1.0
        %240 = vmatprep.subr.mxu0 0.0
        %241 = vmatpush1.msra.mxu0 1.0
        %242 = vmatprep.subr.mxu0 0.0
        %243 = vmatpush1.msra.mxu0 1.0
        %244 = vmatprep.subr.mxu0 0.0
        %245 = vmatpush1.msra.mxu0 1.0
        %246 = vmatprep.subr.mxu0 0.0
        %247 = vmatpush1.msra.mxu0 1.0
        %248 = vmatprep.mubr.f32.mxu0 %v180
        %249 = vmatmul.mubr.f32.gmra.mrb[0].mxu0 %v175
        %v250 = vpop.f32.mrb[0].mxu0
        %v251 = vadd.f32 0.0, %v250
        %v252 = vpop.f32.mrb[0].mxu0
        %253 = vdwg.mxu0
        %254 = vmatprep.subr.mxu0 0.0
        %255 = vmatpush1.msra.mxu0 1.0
        %256 = vmatprep.subr.mxu0 0.0
        %257 = vmatpush1.msra.mxu0 1.0
        %258 = vmatprep.subr.mxu0 0.0
        %259 = vmatpush1.msra.mxu0 1.0
        %260 = vmatprep.subr.mxu0 0.0
        %261 = vmatpush1.msra.mxu0 1.0
        %262 = vmatprep.subr.mxu0 0.0
        %263 = vmatpush1.msra.mxu0 1.0
        %264 = vmatprep.subr.mxu0 0.0
        %265 = vmatpush1.msra.mxu0 1.0
        %266 = vmatprep.subr.mxu0 0.0
        %267 = vmatpush1.msra.mxu0 1.0
        %268 = vmatprep.subr.mxu0 0.0
        %269 = vmatpush1.msra.mxu0 1.0
        %270 = vmatprep.subr.mxu0 0.0
        %271 = vmatpush1.msra.mxu0 1.0
        %272 = vmatprep.subr.mxu0 0.0
        %273 = vmatpush1.msra.mxu0 1.0
        %274 = vmatprep.subr.mxu0 0.0
        %275 = vmatpush1.msra.mxu0 1.0
        %276 = vmatprep.subr.mxu0 0.0
        %277 = vmatpush1.msra.mxu0 1.0
        %278 = vmatprep.subr.mxu0 0.0
        %279 = vmatpush1.msra.mxu0 1.0
        %280 = vmatprep.subr.mxu0 0.0
        %281 = vmatpush1.msra.mxu0 1.0
        %282 = vmatprep.subr.mxu0 0.0
        %283 = vmatpush1.msra.mxu0 1.0
        %284 = vmatprep.subr.mxu0 0.0
        %285 = vmatpush1.msra.mxu0 1.0
        %286 = vmatprep.subr.mxu0 0.0
        %287 = vmatpush1.msra.mxu0 1.0
        %288 = vmatprep.subr.mxu0 0.0
        %289 = vmatpush1.msra.mxu0 1.0
        %290 = vmatprep.subr.mxu0 0.0
        %291 = vmatpush1.msra.mxu0 1.0
        %292 = vmatprep.subr.mxu0 0.0
        %293 = vmatpush1.msra.mxu0 1.0
        %294 = vmatprep.subr.mxu0 0.0
        %295 = vmatpush1.msra.mxu0 1.0
        %296 = vmatprep.subr.mxu0 0.0
        %297 = vmatpush1.msra.mxu0 1.0
        %298 = vmatprep.subr.mxu0 0.0
        %299 = vmatpush1.msra.mxu0 1.0
        %300 = vmatprep.subr.mxu0 0.0
        %301 = vmatpush1.msra.mxu0 1.0
        %302 = vmatprep.subr.mxu0 0.0
        %303 = vmatpush1.msra.mxu0 1.0
        %304 = vmatprep.subr.mxu0 0.0
        %305 = vmatpush1.msra.mxu0 1.0
        %306 = vmatprep.subr.mxu0 0.0
        %307 = vmatpush1.msra.mxu0 1.0
        %308 = vmatprep.subr.mxu0 0.0
        %309 = vmatpush1.msra.mxu0 1.0
        %310 = vmatprep.subr.mxu0 0.0
        %311 = vmatpush1.msra.mxu0 1.0
        %312 = vmatprep.subr.mxu0 0.0
        %313 = vmatpush1.msra.mxu0 1.0
        %314 = vmatprep.subr.mxu0 0.0
        %315 = vmatpush1.msra.mxu0 1.0
        %316 = vmatprep.subr.mxu0 0.0
        %317 = vmatpush1.msra.mxu0 1.0
        %318 = vmatprep.mubr.f32.mxu0 %v181
        %319 = vmatmul.mubr.f32.gmra.mrb[0].mxu0 %v176
        %v320 = vpop.f32.mrb[0].mxu0
        %v321 = vadd.f32 %v251, %v320
        %v322 = vpop.f32.mrb[0].mxu0
        %323 = vdwg.mxu0
        %v324 = vadd.f32 %v177, %v321
        %vm325 = vcmask 3072
        %326 = vst.msk [vmem:[%s168] sm:$0xf] %vm325, %v324
        %p327 = scmp.lt.s32.totalorder %s20, 1
        %s328 = scalar_select %p327, %s20, 1
        %p329 = scmp.lt.s32.totalorder %s21, 0
        %s330 = scalar_select %p329, %s21, 0
        %s331 = sadd.s32 %s330, %s328
        %s332 = smul.addr %s331, 4
        %s333 = scalar_lea.vmem %s1, %s332
        // Predicated region
        $region33: #{tpu_custom_call.1} parent=23 // pred_check
          %p334 = pneg %p84
        $region34: #{tpu_custom_call.1} parent=23 // pred_check_branch
          %336 = sbr.rel (%p334) target = $region36
        $region35: #{tpu_custom_call.1} parent=23 // pred_region
          _
        $region36: #{tpu_custom_call.1} parent=23 // pred_fallthru
          _
      $region24: #{tpu_custom_call.1} parent=5 // pred_fallthru
        _
      %p337 = scmp.le.s32.totalorder 2, %s10
      // Predicated region
      $region37: #{tpu_custom_call.1} parent=5 // pred_check
        %p338 = pneg %p337
      $region38: #{tpu_custom_call.1} parent=5 // pred_check_branch
        %340 = sbr.rel (%p338) target = $region40
      $region39: #{tpu_custom_call.1} parent=5 // pred_region
        %s341 = ssub.s32 %s10, 2
        // Predicated region
        $region41: #{tpu_custom_call.1} parent=39 // pred_check
          %p342 = pneg %p90
        $region42: #{tpu_custom_call.1} parent=39 // pred_check_branch
          %344 = sbr.rel (%p342) target = $region44
        $region43: #{tpu_custom_call.1} parent=39 // pred_region
          %p345 = scmp.lt.s32.totalorder %s23, 1
          %s346 = scalar_select %p345, %s23, 1
          %p347 = scmp.lt.s32.totalorder %s24, 0
          %s348 = scalar_select %p347, %s24, 0
          %s349 = sadd.s32 %s348, %s346
          %s350 = smul.addr %s349, 4
          %s351 = scalar_lea.vmem %s1, %s350
        $region44: #{tpu_custom_call.1} parent=39 // pred_fallthru
          _
      $region40: #{tpu_custom_call.1} parent=5 // pred_fallthru
        _
    $region6: #{tpu_custom_call.1} parent=1 // loop_footer
      %s14 = sadd.s32 1, %s10
    $region7: #{tpu_custom_call.1} parent=1 // loop_footer_branch
      %9 = sbr.rel target = $region3
    $region8: #{tpu_custom_call.1} parent=1 // loop_exit
      _
    %352 = vsyncpa [#allocation3], 1
    %s353 = scalar_lea.sflag [#allocation3], 1
    %354 = vsyncpa %s353, 1

</llo_original>
